<compile_context>
chip_gen: v7x
topology: tpu7x:2x2x1
jax: 0.10.0
libtpu: 0.0.40
codegen_flags: <defaults>
</compile_context>

<pallas_src>
import functools

import jax
import jax.numpy as jnp
from jax.experimental import pallas as pl
from jax.experimental.pallas import tpu as pltpu


# ----------------------------- configuration -------------------------------
IN_DIM = 2            # f(x, y) -> 2 spatial inputs
OUT_DIM = 1
LAYERS = 4            # input layer + (LAYERS-2) hidden + output layer
NEURONS = 32
VEC_SCEN = 4          # number of scenarios (latent vectors)
VEC_SIZE = 16         # latent vector size
RESIDUAL = False
BATCH = 8             # must be divisible by VEC_SCEN and by 8 (f32 sublanes)

FEAT = IN_DIM + VEC_SIZE          # MLP input feature dim after latent concat
NUM_HIDDEN = LAYERS - 2
OUT_PAD = 128                     # lane-dense output slab width
MAX_BATCH_TILE = 256              # batch tile for large batches


# ------------------------------ Pallas kernel ------------------------------
def _latent_mlp_kernel(x_ref,        # VMEM (TB, FEAT)
                       w_in_ref,     # VMEM (FEAT, NEURONS)
                       b_in_ref,     # VMEM (1, NEURONS)
                       w_h_ref,      # VMEM (NUM_HIDDEN, NEURONS, NEURONS)
                       b_h_ref,      # VMEM (NUM_HIDDEN, 1, NEURONS)
                       w_out_ref,    # VMEM (NEURONS, OUT_PAD)  zero-padded
                       b_out_ref,    # VMEM (1, OUT_PAD)        zero-padded
                       out_ref,      # VMEM (TB, OUT_PAD)       lane-dense
                       *, num_hidden, residual):
    # input layer: tanh(x @ W_in + b_in)
    h = jnp.tanh(
        jnp.dot(x_ref[...], w_in_ref[...], preferred_element_type=jnp.float32)
        + b_in_ref[...]
    )

    # hidden layers (static unrolled loop)
    for j in range(num_hidden):
        z = (jnp.dot(h, w_h_ref[j], preferred_element_type=jnp.float32)
             + b_h_ref[j])
        if residual:
            z = z + h
        h = jnp.tanh(z)

    # output layer (no activation), lane-dense store
    out_ref[...] = (
        jnp.dot(h, w_out_ref[...], preferred_element_type=jnp.float32)
        + b_out_ref[...]
    ).astype(out_ref.dtype)


def latent_mlp_pallas(x_feat, w_in, b_in, w_h, b_h, w_out_pad, b_out_pad):
    """Runs the latent MLP; x_feat is (B, FEAT) float32; returns (B, OUT_PAD)."""
    B, feat = x_feat.shape
    num_hidden = w_h.shape[0]
    out_pad = w_out_pad.shape[-1]

    tb = B if B <= MAX_BATCH_TILE else MAX_BATCH_TILE
    assert B % tb == 0 and tb % 8 == 0, "batch must tile into multiples of 8"
    grid = (B // tb,)

    kernel = functools.partial(_latent_mlp_kernel,
                               num_hidden=num_hidden, residual=RESIDUAL)
    return pl.pallas_call(
        kernel,
        out_shape=jax.ShapeDtypeStruct((B, out_pad), jnp.float32),
        grid=grid,
        in_specs=[
            pl.BlockSpec((tb, feat), lambda i: (i, 0)),                    # x_feat
            pl.BlockSpec((feat, NEURONS), lambda i: (0, 0)),               # w_in
            pl.BlockSpec((1, NEURONS), lambda i: (0, 0)),                  # b_in
            pl.BlockSpec((num_hidden, NEURONS, NEURONS),
                         lambda i: (0, 0, 0)),                             # w_h
            pl.BlockSpec((num_hidden, 1, NEURONS), lambda i: (0, 0, 0)),   # b_h
            pl.BlockSpec((NEURONS, out_pad), lambda i: (0, 0)),            # w_out
            pl.BlockSpec((1, out_pad), lambda i: (0, 0)),                  # b_out
        ],
        out_specs=pl.BlockSpec((tb, out_pad), lambda i: (i, 0)),
        compiler_params=pltpu.CompilerParams(
            dimension_semantics=("parallel",)),
    )(x_feat, w_in, b_in, w_h, b_h, w_out_pad, b_out_pad)


# ----------------------------- parameter setup -----------------------------
def init_params(key):
    """Deterministic synthetic parameters (kaiming-like scaled normals)."""
    keys = jax.random.split(key, 4)

    def _w(k, shape, fan_in):
        return jax.random.normal(k, shape, jnp.float32) / jnp.sqrt(fan_in)

    latent_vec = (jax.random.normal(keys[0], (VEC_SCEN, VEC_SIZE), jnp.float32)
                  / jnp.sqrt(VEC_SIZE))

    w_in = _w(keys[1], (FEAT, NEURONS), FEAT)
    b_in = jnp.zeros((1, NEURONS), jnp.float32)
    w_h = _w(keys[2], (NUM_HIDDEN, NEURONS, NEURONS), NEURONS)
    b_h = jnp.zeros((NUM_HIDDEN, 1, NEURONS), jnp.float32)
    w_out = _w(keys[3], (NEURONS, OUT_DIM), NEURONS)
    b_out = jnp.zeros((1, OUT_DIM), jnp.float32)

    # Pre-pad the output layer once to a lane-dense slab (extra columns = 0),
    # so the kernel's final store is an unmasked 128-lane vst.
    w_out_pad = jnp.zeros((NEURONS, OUT_PAD), jnp.float32).at[:, :OUT_DIM].set(w_out)
    b_out_pad = jnp.zeros((1, OUT_PAD), jnp.float32).at[:, :OUT_DIM].set(b_out)

    return (latent_vec, w_in, b_in, w_h, b_h, w_out, b_out,
            w_out_pad, b_out_pad)


# --------------------------------- forward ---------------------------------
@jax.jit
def forward(x, params):
    """Full LatentMLPSequential forward. x: (B, IN_DIM) float32."""
    (latent_vec, w_in, b_in, w_h, b_h, _w_out, _b_out,
     w_out_pad, b_out_pad) = params
    B = x.shape[0]

    # latent vector repeated per scenario block, then concat along features
    # (matches latent_vec.view(S,1,V).repeat(1, B//S, 1).view(-1, V))
    latent = jnp.repeat(latent_vec, B // VEC_SCEN, axis=0)   # (B, VEC_SIZE)
    x_feat = jnp.concatenate([x, latent], axis=1)            # (B, FEAT)

    slab = latent_mlp_pallas(x_feat, w_in, b_in, w_h, b_h,
                             w_out_pad, b_out_pad)            # (B, OUT_PAD)
    return slab[:, :OUT_DIM]


def forward_ref(x, params):
    """Pure-JAX reference for correctness checking."""
    (latent_vec, w_in, b_in, w_h, b_h, w_out, b_out, *_rest) = params
    B = x.shape[0]
    latent = jnp.repeat(latent_vec, B // VEC_SCEN, axis=0)
    x_feat = jnp.concatenate([x, latent], axis=1)

    h = jnp.tanh(x_feat @ w_in + b_in)
    for j in range(NUM_HIDDEN):
        z = h @ w_h[j] + b_h[j]
        if RESIDUAL:
            z = z + h
        h = jnp.tanh(z)
    return h @ w_out + b_out


# ---------------------------------- main -----------------------------------
if __name__ == "__main__":
    key = jax.random.PRNGKey(0)
    k_param, k_x = jax.random.split(key)

    params = init_params(k_param)
    x = jax.random.normal(k_x, (BATCH, IN_DIM), jnp.float32)

    out = forward(x, params)
    out = jax.block_until_ready(out)

    ref = forward_ref(x, params)
    assert out.shape == (BATCH, OUT_DIM)
    assert jnp.allclose(out, ref, atol=1e-5, rtol=1e-5), (out, ref)

    print("KERNEL_OK")
</pallas_src>

<mosaic_0001>
module attributes {stable_mosaic.version = 11 : i64} {
  func.func @_latent_mlp_kernel(%arg0: i32, %arg1: memref<8x18xf32, #tpu.memory_space<vmem>>, %arg2: memref<18x32xf32, #tpu.memory_space<vmem>>, %arg3: memref<1x32xf32, #tpu.memory_space<vmem>>, %arg4: memref<2x32x32xf32, #tpu.memory_space<vmem>>, %arg5: memref<2x1x32xf32, #tpu.memory_space<vmem>>, %arg6: memref<32x128xf32, #tpu.memory_space<vmem>>, %arg7: memref<1x128xf32, #tpu.memory_space<vmem>>, %arg8: memref<8x128xf32, #tpu.memory_space<vmem>>) attributes {dimension_semantics = [#tpu.dimension_semantics<parallel>], iteration_bounds = array<i64: 1>, scalar_prefetch = 0 : i64, scratch_operands = 0 : i64, tpu.core_type = #tpu.core_type<tc>, window_params = [{transform_indices = @transform_0, window_bounds = array<i64: 8, 18>}, {pipeline_mode = #tpu.pipeline_mode<synchronous>, transform_indices = @transform_1, window_bounds = array<i64: 18, 32>}, {pipeline_mode = #tpu.pipeline_mode<synchronous>, transform_indices = @transform_2, window_bounds = array<i64: 1, 32>}, {pipeline_mode = #tpu.pipeline_mode<synchronous>, transform_indices = @transform_3, window_bounds = array<i64: 2, 32, 32>}, {pipeline_mode = #tpu.pipeline_mode<synchronous>, transform_indices = @transform_4, window_bounds = array<i64: 2, 1, 32>}, {pipeline_mode = #tpu.pipeline_mode<synchronous>, transform_indices = @transform_5, window_bounds = array<i64: 32, 128>}, {pipeline_mode = #tpu.pipeline_mode<synchronous>, transform_indices = @transform_6, window_bounds = array<i64: 1, 128>}, {transform_indices = @transform_7, window_bounds = array<i64: 8, 128>}]} {
    %c0 = arith.constant 0 : index
    %c0_0 = arith.constant 0 : index
    %0 = vector.load %arg1[%c0, %c0_0] : memref<8x18xf32, #tpu.memory_space<vmem>>, vector<8x18xf32>
    %c0_1 = arith.constant 0 : index
    %c0_2 = arith.constant 0 : index
    %1 = vector.load %arg2[%c0_1, %c0_2] : memref<18x32xf32, #tpu.memory_space<vmem>>, vector<18x32xf32>
    %cst = arith.constant dense<0.000000e+00> : vector<8x32xf32>
    %2 = tpu.matmul %0, %1, %cst {dimension_numbers = #tpu.dot_dimension_numbers<[1], [0], [0], [1], [0, 0, 1, 1], [], []>} : vector<8x18xf32>, vector<18x32xf32>, vector<8x32xf32> -> vector<8x32xf32>
    %c0_3 = arith.constant 0 : index
    %c0_4 = arith.constant 0 : index
    %3 = vector.load %arg3[%c0_3, %c0_4] : memref<1x32xf32, #tpu.memory_space<vmem>>, vector<1x32xf32>
    %4 = vector.broadcast %3 : vector<1x32xf32> to vector<8x32xf32>
    %5 = arith.addf %2, %4 : vector<8x32xf32>
    %6 = math.tanh %5 : vector<8x32xf32>
    %c0_5 = arith.constant 0 : index
    %c0_6 = arith.constant 0 : index
    %c0_7 = arith.constant 0 : index
    %7 = vector.load %arg4[%c0_5, %c0_6, %c0_7] : memref<2x32x32xf32, #tpu.memory_space<vmem>>, vector<1x32x32xf32>
    %8 = vector.shape_cast %7 : vector<1x32x32xf32> to vector<32x32xf32>
    %cst_8 = arith.constant dense<0.000000e+00> : vector<8x32xf32>
    %9 = tpu.matmul %6, %8, %cst_8 {dimension_numbers = #tpu.dot_dimension_numbers<[1], [0], [0], [1], [0, 0, 1, 1], [], []>} : vector<8x32xf32>, vector<32x32xf32>, vector<8x32xf32> -> vector<8x32xf32>
    %c0_9 = arith.constant 0 : index
    %c0_10 = arith.constant 0 : index
    %c0_11 = arith.constant 0 : index
    %10 = vector.load %arg5[%c0_9, %c0_10, %c0_11] : memref<2x1x32xf32, #tpu.memory_space<vmem>>, vector<1x1x32xf32>
    %11 = vector.shape_cast %10 : vector<1x1x32xf32> to vector<1x32xf32>
    %12 = vector.broadcast %11 : vector<1x32xf32> to vector<8x32xf32>
    %13 = arith.addf %9, %12 : vector<8x32xf32>
    %14 = math.tanh %13 : vector<8x32xf32>
    %c1 = arith.constant 1 : index
    %c0_12 = arith.constant 0 : index
    %c0_13 = arith.constant 0 : index
    %15 = vector.load %arg4[%c1, %c0_12, %c0_13] : memref<2x32x32xf32, #tpu.memory_space<vmem>>, vector<1x32x32xf32>
    %16 = vector.shape_cast %15 : vector<1x32x32xf32> to vector<32x32xf32>
    %cst_14 = arith.constant dense<0.000000e+00> : vector<8x32xf32>
    %17 = tpu.matmul %14, %16, %cst_14 {dimension_numbers = #tpu.dot_dimension_numbers<[1], [0], [0], [1], [0, 0, 1, 1], [], []>} : vector<8x32xf32>, vector<32x32xf32>, vector<8x32xf32> -> vector<8x32xf32>
    %c1_15 = arith.constant 1 : index
    %c0_16 = arith.constant 0 : index
    %c0_17 = arith.constant 0 : index
    %18 = vector.load %arg5[%c1_15, %c0_16, %c0_17] : memref<2x1x32xf32, #tpu.memory_space<vmem>>, vector<1x1x32xf32>
    %19 = vector.shape_cast %18 : vector<1x1x32xf32> to vector<1x32xf32>
    %20 = vector.broadcast %19 : vector<1x32xf32> to vector<8x32xf32>
    %21 = arith.addf %17, %20 : vector<8x32xf32>
    %22 = math.tanh %21 : vector<8x32xf32>
    %c0_18 = arith.constant 0 : index
    %c0_19 = arith.constant 0 : index
    %23 = vector.load %arg6[%c0_18, %c0_19] : memref<32x128xf32, #tpu.memory_space<vmem>>, vector<32x128xf32>
    %cst_20 = arith.constant dense<0.000000e+00> : vector<8x128xf32>
    %24 = tpu.matmul %22, %23, %cst_20 {dimension_numbers = #tpu.dot_dimension_numbers<[1], [0], [0], [1], [0, 0, 1, 1], [], []>} : vector<8x32xf32>, vector<32x128xf32>, vector<8x128xf32> -> vector<8x128xf32>
    %c0_21 = arith.constant 0 : index
    %c0_22 = arith.constant 0 : index
    %25 = vector.load %arg7[%c0_21, %c0_22] : memref<1x128xf32, #tpu.memory_space<vmem>>, vector<1x128xf32>
    %26 = vector.broadcast %25 : vector<1x128xf32> to vector<8x128xf32>
    %27 = arith.addf %24, %26 : vector<8x128xf32>
    %c0_23 = arith.constant 0 : index
    %c0_24 = arith.constant 0 : index
    %28 = vector.load %arg8[%c0_23, %c0_24] : memref<8x128xf32, #tpu.memory_space<vmem>>, vector<8x128xf32>
    tpu.vector_store %arg8[%c0_23, %c0_24], %27 {strides = array<i32>} : memref<8x128xf32, #tpu.memory_space<vmem>>, vector<8x128xf32>,
    return
  }
  func.func @transform_0(%arg0: i32) -> (i32, i32) {
    %c0_i32 = arith.constant 0 : i32
    %c0_i32_0 = arith.constant 0 : i32
    return %arg0, %c0_i32 : i32, i32
  }
  func.func @transform_1(%arg0: i32) -> (i32, i32) {
    %c0_i32 = arith.constant 0 : i32
    %c0_i32_0 = arith.constant 0 : i32
    %c0_i32_1 = arith.constant 0 : i32
    return %c0_i32, %c0_i32_0 : i32, i32
  }
  func.func @transform_2(%arg0: i32) -> (i32, i32) {
    %c0_i32 = arith.constant 0 : i32
    %c0_i32_0 = arith.constant 0 : i32
    %c0_i32_1 = arith.constant 0 : i32
    return %c0_i32, %c0_i32_0 : i32, i32
  }
  func.func @transform_3(%arg0: i32) -> (i32, i32, i32) {
    %c0_i32 = arith.constant 0 : i32
    %c0_i32_0 = arith.constant 0 : i32
    %c0_i32_1 = arith.constant 0 : i32
    %c0_i32_2 = arith.constant 0 : i32
    return %c0_i32, %c0_i32_0, %c0_i32_1 : i32, i32, i32
  }
  func.func @transform_4(%arg0: i32) -> (i32, i32, i32) {
    %c0_i32 = arith.constant 0 : i32
    %c0_i32_0 = arith.constant 0 : i32
    %c0_i32_1 = arith.constant 0 : i32
    %c0_i32_2 = arith.constant 0 : i32
    return %c0_i32, %c0_i32_0, %c0_i32_1 : i32, i32, i32
  }
  func.func @transform_5(%arg0: i32) -> (i32, i32) {
    %c0_i32 = arith.constant 0 : i32
    %c0_i32_0 = arith.constant 0 : i32
    %c0_i32_1 = arith.constant 0 : i32
    return %c0_i32, %c0_i32_0 : i32, i32
  }
  func.func @transform_6(%arg0: i32) -> (i32, i32) {
    %c0_i32 = arith.constant 0 : i32
    %c0_i32_0 = arith.constant 0 : i32
    %c0_i32_1 = arith.constant 0 : i32
    return %c0_i32, %c0_i32_0 : i32, i32
  }
  func.func @transform_7(%arg0: i32) -> (i32, i32) {
    %c0_i32 = arith.constant 0 : i32
    %c0_i32_0 = arith.constant 0 : i32
    return %arg0, %c0_i32 : i32, i32
  }
}

</mosaic_0001>

<llo_original>
// kernel: forward.1
$region0: #{forward.1}
  #allocation0 [shape = 'u32[]', space=smem, size = 0x4, offset = 0x4, fixed_abs, tag = 'smem constant byte address 0x4 - core index']
  #allocation1 [shape = 'u32[144,128]{1,0:T(1,128)}', space=vmem, size = 0x12000, scoped, tag = 'internal scratch']
  %s0 = inlined_call_operand.vmem [shape: f32[8,18], index: 0, kind: input, shape index: {}]
  %s1 = inlined_call_operand.hbm [shape: f32[18,32], index: 1, kind: input, shape index: {}]
  %s2 = inlined_call_operand.hbm [shape: f32[1,32], index: 2, kind: input, shape index: {}]
  %s3 = inlined_call_operand.vmem [shape: f32[2,32,32], index: 3, kind: input, shape index: {}]
  %s4 = inlined_call_operand.vmem [shape: f32[2,1,32], index: 4, kind: input, shape index: {}]
  %s5 = inlined_call_operand.hbm [shape: f32[32,128], index: 5, kind: input, shape index: {}]
  %s6 = inlined_call_operand.vmem [shape: f32[1,128], index: 6, kind: input, shape index: {}]
  %s7 = inlined_call_operand.vmem [shape: f32[8,128], index: 7, kind: output, shape index: {}]
  %s8 = sld [smem:[#allocation0]]
  $region50: #{forward.1} parent=0
    _
  %s10 = ssub.s32 1, %s8
  %s11 = scalar_select 0, %s10, %s8
  $region1: #{forward.1} parent=0
    #allocation2 [shape = 'u8[12288]{0}', space=vmem, size = 0x3000, scoped, tag = 'input window, operand 1, single buffered']
    #allocation3 [shape = 's32[1]{0}', space=sflag, size = 0x4, scoped, tag = 'scoped memory for forward.1']
    #allocation4 [shape = 'u8[512]{0}', space=vmem, size = 0x400, scoped, tag = 'input window, operand 2, single buffered']
    #allocation5 [shape = 's32[1]{0}', space=sflag, size = 0x4, scoped, tag = 'scoped memory for forward.1']
    #allocation6 [shape = 'u8[16384]{0}', space=vmem, size = 0x4000, scoped, tag = 'input window, operand 5, single buffered']
    %12 = vsyncpa [#allocation3], 0
    %13 = vsyncpa [#allocation5], 0
    // Predicated region
    $region2: #{forward.1} parent=1 // pred_check
      _
    $region3: #{forward.1} parent=1 // pred_check_branch
      %15 = sbr.rel (0) target = $region5
    $region4: #{forward.1} parent=1 // pred_region
      _
    $region5: #{forward.1} parent=1 // pred_fallthru
      _
    // Predicated region
    $region6: #{forward.1} parent=1 // pred_check
      _
    $region7: #{forward.1} parent=1 // pred_check_branch
      %17 = sbr.rel (0) target = $region9
    $region8: #{forward.1} parent=1 // pred_region
      %s19 = ssub.s32 384, 384
      %20 = vsyncadd [#allocation3], %s19
      %s21 = sshll.u32 [#allocation2], 4
      %s22 = int_to_ptr.vmem [resolvable:$true] %s21
      %27 = dma.hbm_to_vmem [thread:$0]  %s1, 384, %s22, [#allocation3], 128, 128, 8
    $region9: #{forward.1} parent=1 // pred_fallthru
      _
    // Predicated region
    $region10: #{forward.1} parent=1 // pred_check
      _
    $region11: #{forward.1} parent=1 // pred_check_branch
      %29 = sbr.rel (0) target = $region13
    $region12: #{forward.1} parent=1 // pred_region
      %s31 = ssub.s32 16, 16
      %32 = vsyncadd [#allocation5], %s31
      %s34 = sshll.u32 [#allocation4], 4
      %s35 = int_to_ptr.vmem [resolvable:$true] %s34
      %37 = dma.hbm_to_vmem [thread:$0]  %s2, 16, %s35, [#allocation5]
    $region13: #{forward.1} parent=1 // pred_fallthru
      _
    // Predicated region
    $region14: #{forward.1} parent=1 // pred_check
      _
    $region15: #{forward.1} parent=1 // pred_check_branch
      %39 = sbr.rel (0) target = $region17
    $region16: #{forward.1} parent=1 // pred_region
      _
    $region17: #{forward.1} parent=1 // pred_fallthru
      _
    // Predicated region
    $region18: #{forward.1} parent=1 // pred_check
      _
    $region19: #{forward.1} parent=1 // pred_check_branch
      %41 = sbr.rel (0) target = $region21
    $region20: #{forward.1} parent=1 // pred_region
      _
    $region21: #{forward.1} parent=1 // pred_fallthru
      _
    // Predicated region
    $region22: #{forward.1} parent=1 // pred_check
      _
    $region23: #{forward.1} parent=1 // pred_check_branch
      %43 = sbr.rel (0) target = $region25
    $region24: #{forward.1} parent=1 // pred_region
      %s45 = ssub.s32 512, 512
      %46 = vsyncadd [#allocation5], %s45
      %s47 = sshll.u32 [#allocation6], 4
      %s48 = int_to_ptr.vmem [resolvable:$true] %s47
      %53 = dma.hbm_to_vmem [thread:$0]  %s5, 512, %s48, [#allocation5], 128, 128, 8
    $region25: #{forward.1} parent=1 // pred_fallthru
      _
    // Predicated region
    $region26: #{forward.1} parent=1 // pred_check
      _
    $region27: #{forward.1} parent=1 // pred_check_branch
      %55 = sbr.rel (0) target = $region29
    $region28: #{forward.1} parent=1 // pred_region
      _
    $region29: #{forward.1} parent=1 // pred_fallthru
      _
    // Predicated region
    $region30: #{forward.1} parent=1 // pred_check
      _
    $region31: #{forward.1} parent=1 // pred_check_branch
      %57 = sbr.rel (0) target = $region33
    $region32: #{forward.1} parent=1 // pred_region
      %58 = dma.done [#allocation3], 384
    $region33: #{forward.1} parent=1 // pred_fallthru
      _
    // Predicated region
    $region34: #{forward.1} parent=1 // pred_check
      _
    $region35: #{forward.1} parent=1 // pred_check_branch
      %60 = sbr.rel (0) target = $region37
    $region36: #{forward.1} parent=1 // pred_region
      %61 = dma.done [#allocation5], 16
    $region37: #{forward.1} parent=1 // pred_fallthru
      _
    // Predicated region
    $region38: #{forward.1} parent=1 // pred_check
      _
    $region39: #{forward.1} parent=1 // pred_check_branch
      %63 = sbr.rel (0) target = $region41
    $region40: #{forward.1} parent=1 // pred_region
      %64 = dma.done [#allocation5], 512
    $region41: #{forward.1} parent=1 // pred_fallthru
      _
    %v65 = vld [vmem:[%s0] sm:$0xff]
    %v66 = vld [vmem:[#allocation2] sm:$0xff]
    %v67 = vld [vmem:[#allocation2 + $0x8] sm:$0xff]
    %v68 = vld [vmem:[#allocation2 + $0x10] sm:$0x3]
    %v69 = vld [vmem:[#allocation4] sm:$0x1]
    %v71 = vlaneseq
    %v72 = vshrl.u32 %v71, 7
    %v73 = vsub.s32 0, %v72
    %v74 = vrot.slane %v69, %v73
    %vm76 = vcmask 146432
    %v78 = vsel %vm76, %v65, 0
    %vm80 = vcmask 1041408
    %v82 = vsel %vm80, %v68, 0
    %84 = vmatprep.subr.mxu0 0.0
    %85 = vmatpush1.msra.mxu0 %v66
    %86 = vmatprep.subr.mxu0 0.0
    %87 = vmatpush1.msra.mxu0 %v67
    %88 = vmatprep.subr.mxu0 0.0
    %89 = vmatpush1.msra.mxu0 %v82
    %90 = vmatprep.subr.mxu0 0.0
    %91 = vmatpush1.msra.mxu0 0.0
    %92 = vmatprep.subr.mxu0 0.0
    %93 = vmatpush1.msra.mxu0 0.0
    %94 = vmatprep.subr.mxu0 0.0
    %95 = vmatpush1.msra.mxu0 0.0
    %96 = vmatprep.subr.mxu0 0.0
    %97 = vmatpush1.msra.mxu0 0.0
    %98 = vmatprep.subr.mxu0 0.0
    %99 = vmatpush1.msra.mxu0 0.0
    %100 = vmatprep.subr.mxu0 0.0
    %101 = vmatpush1.msra.mxu0 0.0
    %102 = vmatprep.subr.mxu0 0.0
    %103 = vmatpush1.msra.mxu0 0.0
    %104 = vmatprep.subr.mxu0 0.0
    %105 = vmatpush1.msra.mxu0 0.0
    %106 = vmatprep.subr.mxu0 0.0
    %107 = vmatpush1.msra.mxu0 0.0
    %108 = vmatprep.subr.mxu0 0.0
    %109 = vmatpush1.msra.mxu0 0.0
    %110 = vmatprep.subr.mxu0 0.0
    %111 = vmatpush1.msra.mxu0 0.0
    %112 = vmatprep.subr.mxu0 0.0
    %113 = vmatpush1.msra.mxu0 0.0
    %114 = vmatprep.subr.mxu0 0.0
    %115 = vmatpush1.msra.mxu0 0.0
    %116 = vmatprep.subr.mxu0 0.0
    %117 = vmatpush1.msra.mxu0 0.0
    %118 = vmatprep.subr.mxu0 0.0
    %119 = vmatpush1.msra.mxu0 0.0
    %120 = vmatprep.subr.mxu0 0.0
    %121 = vmatpush1.msra.mxu0 0.0
    %122 = vmatprep.subr.mxu0 0.0
    %123 = vmatpush1.msra.mxu0 0.0
    %124 = vmatprep.subr.mxu0 0.0
    %125 = vmatpush1.msra.mxu0 0.0
    %126 = vmatprep.subr.mxu0 0.0
    %127 = vmatpush1.msra.mxu0 0.0
    %128 = vmatprep.subr.mxu0 0.0
    %129 = vmatpush1.msra.mxu0 0.0
    %130 = vmatprep.subr.mxu0 0.0
    %131 = vmatpush1.msra.mxu0 0.0
    %132 = vmatprep.subr.mxu0 0.0
    %133 = vmatpush1.msra.mxu0 0.0
    %134 = vmatprep.subr.mxu0 0.0
    %135 = vmatpush1.msra.mxu0 0.0
    %136 = vmatprep.subr.mxu0 0.0
    %137 = vmatpush1.msra.mxu0 0.0
    %138 = vmatprep.subr.mxu0 0.0
    %139 = vmatpush1.msra.mxu0 0.0
    %140 = vmatprep.subr.mxu0 0.0
    %141 = vmatpush1.msra.mxu0 0.0
    %142 = vmatprep.subr.mxu0 0.0
    %143 = vmatpush1.msra.mxu0 0.0
    %144 = vmatprep.subr.mxu0 0.0
    %145 = vmatpush1.msra.mxu0 0.0
    %146 = vmatprep.subr.mxu0 0.0
    %147 = vmatpush1.msra.mxu0 0.0
    %148 = vmatprep.mubr.f32.mxu0 0.0
    %149 = vmatmul.mubr.f32.gmra.mrb[0].mxu0 %v78
    %v150 = vpop.f32.mrb[0].mxu0
    %v151 = vadd.f32 %v74, %v150
    %v152 = vpop.f32.mrb[0].mxu0
    %153 = vdwg.mxu0
    %v154 = vtanh.pop %v151
    %v155 = vld [vmem:[%s3] sm:$0xff]
    %v156 = vld [vmem:[%s3 + $0x8] sm:$0xff]
    %v157 = vld [vmem:[%s3 + $0x10] sm:$0xff]
    %v158 = vld [vmem:[%s3 + $0x18] sm:$0xff]
    %v159 = vld [vmem:[%s4] sm:$0x1]
    %v161 = vlaneseq
    %v162 = vshrl.u32 %v161, 7
    %v163 = vsub.s32 0, %v162
    %v164 = vrot.slane %v159, %v163
    %vm166 = vcmask 261120
    %v168 = vsel %vm166, %v154, 0
    %170 = vmatprep.subr.mxu0 0.0
    %171 = vmatpush1.msra.mxu0 %v155
    %172 = vmatprep.subr.mxu0 0.0
    %173 = vmatpush1.msra.mxu0 %v156
    %174 = vmatprep.subr.mxu0 0.0
    %175 = vmatpush1.msra.mxu0 %v157
    %176 = vmatprep.subr.mxu0 0.0
    %177 = vmatpush1.msra.mxu0 %v158
    %178 = vmatprep.subr.mxu0 0.0
    %179 = vmatpush1.msra.mxu0 0.0
    %180 = vmatprep.subr.mxu0 0.0
    %181 = vmatpush1.msra.mxu0 0.0
    %182 = vmatprep.subr.mxu0 0.0
    %183 = vmatpush1.msra.mxu0 0.0
    %184 = vmatprep.subr.mxu0 0.0
    %185 = vmatpush1.msra.mxu0 0.0
    %186 = vmatprep.subr.mxu0 0.0
    %187 = vmatpush1.msra.mxu0 0.0
    %188 = vmatprep.subr.mxu0 0.0
    %189 = vmatpush1.msra.mxu0 0.0
    %190 = vmatprep.subr.mxu0 0.0
    %191 = vmatpush1.msra.mxu0 0.0
    %192 = vmatprep.subr.mxu0 0.0
    %193 = vmatpush1.msra.mxu0 0.0
    %194 = vmatprep.subr.mxu0 0.0
    %195 = vmatpush1.msra.mxu0 0.0
    %196 = vmatprep.subr.mxu0 0.0
    %197 = vmatpush1.msra.mxu0 0.0
    %198 = vmatprep.subr.mxu0 0.0
    %199 = vmatpush1.msra.mxu0 0.0
    %200 = vmatprep.subr.mxu0 0.0
    %201 = vmatpush1.msra.mxu0 0.0
    %202 = vmatprep.subr.mxu0 0.0
    %203 = vmatpush1.msra.mxu0 0.0
    %204 = vmatprep.subr.mxu0 0.0
    %205 = vmatpush1.msra.mxu0 0.0
    %206 = vmatprep.subr.mxu0 0.0
    %207 = vmatpush1.msra.mxu0 0.0
    %208 = vmatprep.subr.mxu0 0.0
    %209 = vmatpush1.msra.mxu0 0.0
    %210 = vmatprep.subr.mxu0 0.0
    %211 = vmatpush1.msra.mxu0 0.0
    %212 = vmatprep.subr.mxu0 0.0
    %213 = vmatpush1.msra.mxu0 0.0
    %214 = vmatprep.subr.mxu0 0.0
    %215 = vmatpush1.msra.mxu0 0.0
    %216 = vmatprep.subr.mxu0 0.0
    %217 = vmatpush1.msra.mxu0 0.0
    %218 = vmatprep.subr.mxu0 0.0
    %219 = vmatpush1.msra.mxu0 0.0
    %220 = vmatprep.subr.mxu0 0.0
    %221 = vmatpush1.msra.mxu0 0.0
    %222 = vmatprep.subr.mxu0 0.0
    %223 = vmatpush1.msra.mxu0 0.0
    %224 = vmatprep.subr.mxu0 0.0
    %225 = vmatpush1.msra.mxu0 0.0
    %226 = vmatprep.subr.mxu0 0.0
    %227 = vmatpush1.msra.mxu0 0.0
    %228 = vmatprep.subr.mxu0 0.0
    %229 = vmatpush1.msra.mxu0 0.0
    %230 = vmatprep.subr.mxu0 0.0
    %231 = vmatpush1.msra.mxu0 0.0
    %232 = vmatprep.subr.mxu0 0.0
    %233 = vmatpush1.msra.mxu0 0.0
    %234 = vmatprep.mubr.f32.mxu0 0.0
    %235 = vmatmul.mubr.f32.gmra.mrb[0].mxu0 %v168
    %v236 = vpop.f32.mrb[0].mxu0
    %v237 = vadd.f32 %v164, %v236
    %v238 = vpop.f32.mrb[0].mxu0
    %239 = vdwg.mxu0
    %v240 = vtanh.pop %v237
    %s241 = scalar_lea.vmem %s3, 32
    %v242 = vld [vmem:[%s241] sm:$0xff]
    %v243 = vld [vmem:[%s241 + $0x8] sm:$0xff]
    %v244 = vld [vmem:[%s241 + $0x10] sm:$0xff]
    %v245 = vld [vmem:[%s241 + $0x18] sm:$0xff]
    %s246 = scalar_lea.vmem %s4, 1
    %v247 = vld [vmem:[%s246] sm:$0x1]
    %v249 = vlaneseq
    %v250 = vshrl.u32 %v249, 7
    %v251 = vsub.s32 0, %v250
    %v252 = vrot.slane %v247, %v251
    %v255 = vsel %vm166, %v240, 0
    %257 = vmatprep.subr.mxu0 0.0
    %258 = vmatpush1.msra.mxu0 %v242
    %259 = vmatprep.subr.mxu0 0.0
    %260 = vmatpush1.msra.mxu0 %v243
    %261 = vmatprep.subr.mxu0 0.0
    %262 = vmatpush1.msra.mxu0 %v244
    %263 = vmatprep.subr.mxu0 0.0
    %264 = vmatpush1.msra.mxu0 %v245
    %265 = vmatprep.subr.mxu0 0.0
    %266 = vmatpush1.msra.mxu0 0.0
    %267 = vmatprep.subr.mxu0 0.0
    %268 = vmatpush1.msra.mxu0 0.0
    %269 = vmatprep.subr.mxu0 0.0
    %270 = vmatpush1.msra.mxu0 0.0
    %271 = vmatprep.subr.mxu0 0.0
    %272 = vmatpush1.msra.mxu0 0.0
    %273 = vmatprep.subr.mxu0 0.0
    %274 = vmatpush1.msra.mxu0 0.0
    %275 = vmatprep.subr.mxu0 0.0
    %276 = vmatpush1.msra.mxu0 0.0
    %277 = vmatprep.subr.mxu0 0.0
    %278 = vmatpush1.msra.mxu0 0.0
    %279 = vmatprep.subr.mxu0 0.0
    %280 = vmatpush1.msra.mxu0 0.0
    %281 = vmatprep.subr.mxu0 0.0
    %282 = vmatpush1.msra.mxu0 0.0
    %283 = vmatprep.subr.mxu0 0.0
    %284 = vmatpush1.msra.mxu0 0.0
    %285 = vmatprep.subr.mxu0 0.0
    %286 = vmatpush1.msra.mxu0 0.0
    %287 = vmatprep.subr.mxu0 0.0
    %288 = vmatpush1.msra.mxu0 0.0
    %289 = vmatprep.subr.mxu0 0.0
    %290 = vmatpush1.msra.mxu0 0.0
    %291 = vmatprep.subr.mxu0 0.0
    %292 = vmatpush1.msra.mxu0 0.0
    %293 = vmatprep.subr.mxu0 0.0
    %294 = vmatpush1.msra.mxu0 0.0
    %295 = vmatprep.subr.mxu0 0.0
    %296 = vmatpush1.msra.mxu0 0.0
    %297 = vmatprep.subr.mxu0 0.0
    %298 = vmatpush1.msra.mxu0 0.0
    %299 = vmatprep.subr.mxu0 0.0
    %300 = vmatpush1.msra.mxu0 0.0
    %301 = vmatprep.subr.mxu0 0.0
    %302 = vmatpush1.msra.mxu0 0.0
    %303 = vmatprep.subr.mxu0 0.0
    %304 = vmatpush1.msra.mxu0 0.0
    %305 = vmatprep.subr.mxu0 0.0
    %306 = vmatpush1.msra.mxu0 0.0
    %307 = vmatprep.subr.mxu0 0.0
    %308 = vmatpush1.msra.mxu0 0.0
    %309 = vmatprep.subr.mxu0 0.0
    %310 = vmatpush1.msra.mxu0 0.0
    %311 = vmatprep.subr.mxu0 0.0
    %312 = vmatpush1.msra.mxu0 0.0
    %313 = vmatprep.subr.mxu0 0.0
    %314 = vmatpush1.msra.mxu0 0.0
    %315 = vmatprep.subr.mxu0 0.0
    %316 = vmatpush1.msra.mxu0 0.0
    %317 = vmatprep.subr.mxu0 0.0
    %318 = vmatpush1.msra.mxu0 0.0
    %319 = vmatprep.subr.mxu0 0.0
    %320 = vmatpush1.msra.mxu0 0.0
    %321 = vmatprep.mubr.f32.mxu0 0.0
    %322 = vmatmul.mubr.f32.gmra.mrb[0].mxu0 %v255
    %v323 = vpop.f32.mrb[0].mxu0
    %v324 = vadd.f32 %v252, %v323
    %v325 = vpop.f32.mrb[0].mxu0
    %326 = vdwg.mxu0
    %v327 = vtanh.pop %v324
    %v328 = vld [vmem:[#allocation6] sm:$0xff]
    %v329 = vld [vmem:[#allocation6 + $0x8] sm:$0xff]
    %v330 = vld [vmem:[#allocation6 + $0x10] sm:$0xff]
    %v331 = vld [vmem:[#allocation6 + $0x18] sm:$0xff]
    %v332 = vld [vmem:[%s6] sm:$0x1]
    %v334 = vlaneseq
    %v335 = vshrl.u32 %v334, 7
    %v336 = vsub.s32 0, %v335
    %v337 = vrot.slane %v332, %v336
    %v340 = vsel %vm166, %v327, 0
    %342 = vmatprep.subr.mxu0 0.0
    %343 = vmatpush1.msra.mxu0 %v328
    %344 = vmatprep.subr.mxu0 0.0
    %345 = vmatpush1.msra.mxu0 %v329
    %346 = vmatprep.subr.mxu0 0.0
    %347 = vmatpush1.msra.mxu0 %v330
    %348 = vmatprep.subr.mxu0 0.0
    %349 = vmatpush1.msra.mxu0 %v331
    %350 = vmatprep.subr.mxu0 0.0
    %351 = vmatpush1.msra.mxu0 0.0
    %352 = vmatprep.subr.mxu0 0.0
    %353 = vmatpush1.msra.mxu0 0.0
    %354 = vmatprep.subr.mxu0 0.0
    %355 = vmatpush1.msra.mxu0 0.0
    %356 = vmatprep.subr.mxu0 0.0
    %357 = vmatpush1.msra.mxu0 0.0
    %358 = vmatprep.subr.mxu0 0.0
    %359 = vmatpush1.msra.mxu0 0.0
    %360 = vmatprep.subr.mxu0 0.0
    %361 = vmatpush1.msra.mxu0 0.0
    %362 = vmatprep.subr.mxu0 0.0
    %363 = vmatpush1.msra.mxu0 0.0
    %364 = vmatprep.subr.mxu0 0.0
    %365 = vmatpush1.msra.mxu0 0.0
    %366 = vmatprep.subr.mxu0 0.0
    %367 = vmatpush1.msra.mxu0 0.0
    %368 = vmatprep.subr.mxu0 0.0
    %369 = vmatpush1.msra.mxu0 0.0
    %370 = vmatprep.subr.mxu0 0.0
    %371 = vmatpush1.msra.mxu0 0.0
    %372 = vmatprep.subr.mxu0 0.0
    %373 = vmatpush1.msra.mxu0 0.0
    %374 = vmatprep.subr.mxu0 0.0
    %375 = vmatpush1.msra.mxu0 0.0
    %376 = vmatprep.subr.mxu0 0.0
    %377 = vmatpush1.msra.mxu0 0.0
    %378 = vmatprep.subr.mxu0 0.0
    %379 = vmatpush1.msra.mxu0 0.0
    %380 = vmatprep.subr.mxu0 0.0
    %381 = vmatpush1.msra.mxu0 0.0
    %382 = vmatprep.subr.mxu0 0.0
    %383 = vmatpush1.msra.mxu0 0.0
    %384 = vmatprep.subr.mxu0 0.0
    %385 = vmatpush1.msra.mxu0 0.0
    %386 = vmatprep.subr.mxu0 0.0
    %387 = vmatpush1.msra.mxu0 0.0
    %388 = vmatprep.subr.mxu0 0.0
    %389 = vmatpush1.msra.mxu0 0.0
    %390 = vmatprep.subr.mxu0 0.0
    %391 = vmatpush1.msra.mxu0 0.0
    %392 = vmatprep.subr.mxu0 0.0
    %393 = vmatpush1.msra.mxu0 0.0
    %394 = vmatprep.subr.mxu0 0.0
    %395 = vmatpush1.msra.mxu0 0.0
    %396 = vmatprep.subr.mxu0 0.0
    %397 = vmatpush1.msra.mxu0 0.0
    %398 = vmatprep.subr.mxu0 0.0
    %399 = vmatpush1.msra.mxu0 0.0
    %400 = vmatprep.subr.mxu0 0.0
    %401 = vmatpush1.msra.mxu0 0.0
    %402 = vmatprep.subr.mxu0 0.0
    %403 = vmatpush1.msra.mxu0 0.0
    %404 = vmatprep.subr.mxu0 0.0
    %405 = vmatpush1.msra.mxu0 0.0
    %406 = vmatprep.mubr.f32.mxu0 0.0
    %407 = vmatmul.mubr.f32.gmra.mrb[0].mxu0 %v340
    %v408 = vpop.f32.mrb[0].mxu0
    %v409 = vadd.f32 %v337, %v408
    %v410 = vpop.f32.mrb[0].mxu0
    %411 = vdwg.mxu0
    %412 = vst [vmem:[%s7] sm:$0xff] %v409
    // Predicated region
    $region42: #{forward.1} parent=1 // pred_check
      _
    $region43: #{forward.1} parent=1 // pred_check_branch
      %414 = sbr.rel (0) target = $region45
    $region44: #{forward.1} parent=1 // pred_region
      _
    $region45: #{forward.1} parent=1 // pred_fallthru
      _
    // Predicated region
    $region46: #{forward.1} parent=1 // pred_check
      _
    $region47: #{forward.1} parent=1 // pred_check_branch
      %416 = sbr.rel (0) target = $region49
    $region48: #{forward.1} parent=1 // pred_region
      _
    $region49: #{forward.1} parent=1 // pred_fallthru
      _
    %417 = vsyncpa [#allocation3], 1
    %418 = vsyncpa [#allocation5], 1

</llo_original>
